<compile_context>
chip_gen: v5e
topology: v5e:2x2
jax: 0.10.0
libtpu: 0.0.40
codegen_flags: <defaults>
</compile_context>

<pallas_src>
import functools

import jax
import jax.numpy as jnp
from jax import lax
from jax.experimental import pallas as pl
from jax.experimental.pallas import tpu as pltpu


def _make_divisible(v, divisor=8, min_value=None):
    if min_value is None:
        min_value = divisor
    new_v = max(min_value, int(v + divisor / 2) // divisor * divisor)
    if new_v < 0.9 * v:
        new_v += divisor
    return new_v


def _act(v, h_swish, max_val):
    if h_swish:  # torch.nn.Hardswish: x * clamp(x + 3, 0, 6) / 6
        return v * jnp.clip(v + 3.0, 0.0, 6.0) * (1.0 / 6.0)
    return jnp.clip(v, 0.0, max_val)  # ReLUMax(max_val) == clamp(x, 0, max)


def _phinet_block_kernel(*refs, k_size, dilation, h_swish, has_se,
                         has_expand, skip_conn, max_val):
    it = iter(refs)
    x_ref = next(it)
    if has_expand:
        w_exp_ref, bn1_s_ref, bn1_b_ref = next(it), next(it), next(it)
    w_dw_ref, bn2_s_ref, bn2_b_ref = next(it), next(it), next(it)
    if has_se:
        w_se1_ref, w_se2_ref = next(it), next(it)
    w_proj_ref, bn3_s_ref, bn3_b_ref = next(it), next(it), next(it)
    o_ref = next(it)
    h_pad_ref = next(it)                       # VMEM scratch (C_e, L + pad)

    x = x_ref[0]                               # (C_in, L) f32 in VMEM
    L = x.shape[-1]

    # ---- 1x1 expand causal conv (k=1 => no pad) + BN + activation ----------
    if has_expand:
        h = jnp.dot(w_exp_ref[...], x, preferred_element_type=jnp.float32)
        h = _act(h * bn1_s_ref[...] + bn1_b_ref[...], h_swish, max_val)
    else:
        h = x
    # TODO(synk): Dropout1d(dp_rate) is identity at inference; not implemented.

    # ---- causal depthwise conv (stride == 1) + BN + activation -------------
    pad = dilation * (k_size - 1)
    c_e = h.shape[0]
    if pad > 0:
        h_pad_ref[:, :pad] = jnp.zeros((c_e, pad), dtype=h.dtype)
    h_pad_ref[:, pad:] = h
    y = jnp.zeros_like(h)
    for t in range(k_size):                    # static, fully unrolled
        off = t * dilation
        tap = h_pad_ref[:, off:off + L]        # causal shifted window
        y = y + w_dw_ref[t] * tap              # w_dw_ref[t] : (C_e, 1)
    y = _act(y * bn2_s_ref[...] + bn2_b_ref[...], h_swish, max_val)

    # ---- squeeze-and-excite -------------------------------------------------
    if has_se:
        pooled = jnp.mean(y, axis=1, keepdims=True)              # (C_e, 1)
        s = jnp.dot(w_se1_ref[...], pooled, preferred_element_type=jnp.float32)
        s = _act(s, h_swish, max_val)
        s = jnp.dot(w_se2_ref[...], s, preferred_element_type=jnp.float32)
        y = y * jax.nn.sigmoid(s)

    # ---- 1x1 project causal conv + BN (+ residual) --------------------------
    out = jnp.dot(w_proj_ref[...], y, preferred_element_type=jnp.float32)
    out = out * bn3_s_ref[...] + bn3_b_ref[...]
    if skip_conn:
        out = out + x
    o_ref[0] = out.astype(o_ref.dtype)


def phinet_causal_conv_block(x, params, *, k_size=3, dilation=1, stride=1,
                             h_swish=True, has_se=True, block_id=1, res=True,
                             max_val=6.0):
    """Fused inference forward of PhiNetCausalConvBlock. x: (B, C_in, L)."""
    if stride != 1:
        # TODO(synk): strided (non-residual) depthwise path not implemented.
        raise NotImplementedError("Pallas kernel supports stride == 1 only.")
    B, C_in, L = x.shape
    filters = params["w_proj"].shape[0]
    exp_ch = params["w_dw"].shape[1]
    has_expand = bool(block_id)
    skip_conn = bool(res and C_in == filters and stride == 1)
    pad = dilation * (k_size - 1)

    args = [x]
    in_specs = [pl.BlockSpec((1, C_in, L), lambda b: (b, 0, 0))]

    def add_full(a):  # whole (small) parameter tensor resident per grid step
        args.append(a)
        in_specs.append(pl.BlockSpec(a.shape, lambda b, _n=a.ndim: (0,) * _n))

    if has_expand:
        add_full(params["w_exp"])
        add_full(params["bn1_scale"])
        add_full(params["bn1_bias"])
    add_full(params["w_dw"])
    add_full(params["bn2_scale"])
    add_full(params["bn2_bias"])
    if has_se:
        add_full(params["w_se1"])
        add_full(params["w_se2"])
    add_full(params["w_proj"])
    add_full(params["bn3_scale"])
    add_full(params["bn3_bias"])

    kernel = functools.partial(
        _phinet_block_kernel, k_size=k_size, dilation=dilation,
        h_swish=h_swish, has_se=has_se, has_expand=has_expand,
        skip_conn=skip_conn, max_val=float(max_val))

    return pl.pallas_call(
        kernel,
        out_shape=jax.ShapeDtypeStruct((B, filters, L), x.dtype),
        grid_spec=pltpu.PrefetchScalarGridSpec(
            num_scalar_prefetch=0,
            grid=(B,),
            in_specs=in_specs,
            out_specs=pl.BlockSpec((1, filters, L), lambda b: (b, 0, 0)),
            scratch_shapes=[pltpu.VMEM((exp_ch, L + pad), jnp.float32)],
        ),
        compiler_params=pltpu.CompilerParams(
            dimension_semantics=("parallel",)),
    )(*args)


# ----------------------------- parameter setup -------------------------------
def _fold_bn(gamma, beta, mean, var, eps=1e-3):
    scale = gamma / jnp.sqrt(var + eps)
    bias = beta - mean * scale
    return scale[:, None].astype(jnp.float32), bias[:, None].astype(jnp.float32)


def init_params(key, in_channels, expansion, filters, *, has_se=True,
                block_id=1, k_size=3, divisor=1):
    exp_ch = (_make_divisible(int(expansion * in_channels), divisor=divisor)
              if block_id else in_channels)
    keys = jax.random.split(key, 20)
    p = {}

    def bn(kg, kb, km, kv, c):
        gamma = 1.0 + 0.1 * jax.random.normal(kg, (c,), jnp.float32)
        beta = 0.1 * jax.random.normal(kb, (c,), jnp.float32)
        mean = 0.1 * jax.random.normal(km, (c,), jnp.float32)
        var = jax.random.uniform(kv, (c,), jnp.float32, minval=0.5, maxval=1.5)
        return _fold_bn(gamma, beta, mean, var)

    if block_id:
        p["w_exp"] = (jax.random.normal(keys[0], (exp_ch, in_channels),
                                        jnp.float32) / jnp.sqrt(in_channels))
        p["bn1_scale"], p["bn1_bias"] = bn(keys[1], keys[2], keys[3], keys[4],
                                           exp_ch)
    p["w_dw"] = (jax.random.normal(keys[5], (k_size, exp_ch, 1), jnp.float32)
                 / jnp.sqrt(k_size))
    p["bn2_scale"], p["bn2_bias"] = bn(keys[6], keys[7], keys[8], keys[9],
                                       exp_ch)
    if has_se:
        c_red = _make_divisible(max(1, int(exp_ch / 6)), divisor=divisor)
        p["w_se1"] = (jax.random.normal(keys[10], (c_red, exp_ch), jnp.float32)
                      / jnp.sqrt(exp_ch))
        p["w_se2"] = (jax.random.normal(keys[11], (exp_ch, c_red), jnp.float32)
                      / jnp.sqrt(max(c_red, 1)))
    p["w_proj"] = (jax.random.normal(keys[12], (filters, exp_ch), jnp.float32)
                   / jnp.sqrt(exp_ch))
    p["bn3_scale"], p["bn3_bias"] = bn(keys[13], keys[14], keys[15], keys[16],
                                       filters)
    return p


# ----------------------------- pure-JAX reference ----------------------------
def reference_forward(x, params, *, k_size=3, dilation=1, h_swish=True,
                      has_se=True, block_id=1, res=True, max_val=6.0):
    B, C_in, L = x.shape
    h = x
    if block_id:
        h = jnp.einsum("oc,bcl->bol", params["w_exp"], h)
        h = _act(h * params["bn1_scale"][None] + params["bn1_bias"][None],
                 h_swish, max_val)
    pad = dilation * (k_size - 1)
    hp = jnp.pad(h, ((0, 0), (0, 0), (pad, 0)))
    y = jnp.zeros_like(h)
    for t in range(k_size):
        off = t * dilation
        y = y + params["w_dw"][t][None] * hp[:, :, off:off + L]
    y = _act(y * params["bn2_scale"][None] + params["bn2_bias"][None],
             h_swish, max_val)
    if has_se:
        pooled = jnp.mean(y, axis=2, keepdims=True)
        s = jnp.einsum("rc,bcl->brl", params["w_se1"], pooled)
        s = _act(s, h_swish, max_val)
        s = jnp.einsum("cr,brl->bcl", params["w_se2"], s)
        y = y * jax.nn.sigmoid(s)
    out = jnp.einsum("fc,bcl->bfl", params["w_proj"], y)
    out = out * params["bn3_scale"][None] + params["bn3_bias"][None]
    if res and C_in == params["w_proj"].shape[0]:
        out = out + x
    return out


if __name__ == "__main__":
    key = jax.random.PRNGKey(0)
    kx, kp = jax.random.split(key)

    # Small shapes consistent with the module: (batch, channels, seq).
    B, C_in, L = 2, 8, 16
    expansion, filters = 2.0, 8          # exp_ch = 16, skip connection active

    x = jax.random.normal(kx, (B, C_in, L), dtype=jnp.float32)
    params = init_params(kp, C_in, expansion, filters, has_se=True,
                         block_id=1, k_size=3, divisor=1)

    ok = True
    for h_swish in (True, False):        # Hardswish path and ReLUMax(6) path
        cfg = dict(k_size=3, dilation=1, h_swish=h_swish, has_se=True,
                   block_id=1, res=True, max_val=6.0)
        out = phinet_causal_conv_block(x, params, stride=1, **cfg)
        out = jax.block_until_ready(out)
        ref = reference_forward(x, params, **cfg)
        assert out.shape == ref.shape == (B, filters, L)
        assert out.dtype == x.dtype
        err = float(jnp.max(jnp.abs(out - ref)))
        ok = ok and bool(jnp.allclose(out, ref, atol=3e-3, rtol=3e-3))
        assert ok, f"mismatch vs reference (h_swish={h_swish}): max err {err}"

    print("KERNEL_OK")
</pallas_src>

<mosaic_0001>
module attributes {stable_mosaic.version = 11 : i64} {
  func.func @_phinet_block_kernel(%arg0: i32, %arg1: memref<1x8x16xf32, #tpu.memory_space<vmem>>, %arg2: memref<16x8xf32, #tpu.memory_space<vmem>>, %arg3: memref<16x1xf32, #tpu.memory_space<vmem>>, %arg4: memref<16x1xf32, #tpu.memory_space<vmem>>, %arg5: memref<3x16x1xf32, #tpu.memory_space<vmem>>, %arg6: memref<16x1xf32, #tpu.memory_space<vmem>>, %arg7: memref<16x1xf32, #tpu.memory_space<vmem>>, %arg8: memref<2x16xf32, #tpu.memory_space<vmem>>, %arg9: memref<16x2xf32, #tpu.memory_space<vmem>>, %arg10: memref<8x16xf32, #tpu.memory_space<vmem>>, %arg11: memref<8x1xf32, #tpu.memory_space<vmem>>, %arg12: memref<8x1xf32, #tpu.memory_space<vmem>>, %arg13: memref<1x8x16xf32, #tpu.memory_space<vmem>>, %arg14: memref<16x18xf32, #tpu.memory_space<vmem>>) attributes {dimension_semantics = [#tpu.dimension_semantics<parallel>], iteration_bounds = array<i64: 2>, scalar_prefetch = 0 : i64, scratch_operands = 1 : i64, tpu.core_type = #tpu.core_type<tc>, window_params = [{transform_indices = @transform_0, window_bounds = array<i64: 1, 8, 16>}, {pipeline_mode = #tpu.pipeline_mode<synchronous>, transform_indices = @transform_1, window_bounds = array<i64: 16, 8>}, {pipeline_mode = #tpu.pipeline_mode<synchronous>, transform_indices = @transform_2, window_bounds = array<i64: 16, 1>}, {pipeline_mode = #tpu.pipeline_mode<synchronous>, transform_indices = @transform_3, window_bounds = array<i64: 16, 1>}, {pipeline_mode = #tpu.pipeline_mode<synchronous>, transform_indices = @transform_4, window_bounds = array<i64: 3, 16, 1>}, {pipeline_mode = #tpu.pipeline_mode<synchronous>, transform_indices = @transform_5, window_bounds = array<i64: 16, 1>}, {pipeline_mode = #tpu.pipeline_mode<synchronous>, transform_indices = @transform_6, window_bounds = array<i64: 16, 1>}, {pipeline_mode = #tpu.pipeline_mode<synchronous>, transform_indices = @transform_7, window_bounds = array<i64: 2, 16>}, {pipeline_mode = #tpu.pipeline_mode<synchronous>, transform_indices = @transform_8, window_bounds = array<i64: 16, 2>}, {pipeline_mode = #tpu.pipeline_mode<synchronous>, transform_indices = @transform_9, window_bounds = array<i64: 8, 16>}, {pipeline_mode = #tpu.pipeline_mode<synchronous>, transform_indices = @transform_10, window_bounds = array<i64: 8, 1>}, {pipeline_mode = #tpu.pipeline_mode<synchronous>, transform_indices = @transform_11, window_bounds = array<i64: 8, 1>}, {transform_indices = @transform_12, window_bounds = array<i64: 1, 8, 16>}]} {
    %c0 = arith.constant 0 : index
    %c0_0 = arith.constant 0 : index
    %c0_1 = arith.constant 0 : index
    %0 = vector.load %arg1[%c0, %c0_0, %c0_1] : memref<1x8x16xf32, #tpu.memory_space<vmem>>, vector<1x8x16xf32>
    %1 = vector.shape_cast %0 : vector<1x8x16xf32> to vector<8x16xf32>
    %c0_2 = arith.constant 0 : index
    %c0_3 = arith.constant 0 : index
    %2 = vector.load %arg2[%c0_2, %c0_3] : memref<16x8xf32, #tpu.memory_space<vmem>>, vector<16x8xf32>
    %cst = arith.constant dense<0.000000e+00> : vector<16x16xf32>
    %3 = tpu.matmul %2, %1, %cst {dimension_numbers = #tpu.dot_dimension_numbers<[1], [0], [0], [1], [0, 0, 1, 1], [], []>} : vector<16x8xf32>, vector<8x16xf32>, vector<16x16xf32> -> vector<16x16xf32>
    %c0_4 = arith.constant 0 : index
    %c0_5 = arith.constant 0 : index
    %4 = vector.load %arg3[%c0_4, %c0_5] : memref<16x1xf32, #tpu.memory_space<vmem>>, vector<16x1xf32>
    %5 = vector.broadcast %4 : vector<16x1xf32> to vector<16x16xf32>
    %6 = arith.mulf %3, %5 : vector<16x16xf32>
    %c0_6 = arith.constant 0 : index
    %c0_7 = arith.constant 0 : index
    %7 = vector.load %arg4[%c0_6, %c0_7] : memref<16x1xf32, #tpu.memory_space<vmem>>, vector<16x1xf32>
    %8 = vector.broadcast %7 : vector<16x1xf32> to vector<16x16xf32>
    %9 = arith.addf %6, %8 : vector<16x16xf32>
    %cst_8 = arith.constant 3.000000e+00 : f32
    %10 = vector.broadcast %cst_8 : f32 to vector<16x16xf32>
    %11 = arith.addf %9, %10 : vector<16x16xf32>
    %cst_9 = arith.constant 0.000000e+00 : f32
    %cst_10 = arith.constant 6.000000e+00 : f32
    %12 = vector.broadcast %cst_9 : f32 to vector<16x16xf32>
    %13 = arith.maximumf %12, %11 : vector<16x16xf32>
    %14 = vector.broadcast %cst_10 : f32 to vector<16x16xf32>
    %15 = arith.minimumf %14, %13 : vector<16x16xf32>
    %16 = arith.mulf %9, %15 : vector<16x16xf32>
    %cst_11 = arith.constant 0.166666672 : f32
    %17 = vector.broadcast %cst_11 : f32 to vector<16x16xf32>
    %18 = arith.mulf %16, %17 : vector<16x16xf32>
    %cst_12 = arith.constant 0.000000e+00 : f32
    %19 = vector.broadcast %cst_12 : f32 to vector<16x2xf32>
    %c0_13 = arith.constant 0 : index
    %c0_14 = arith.constant 0 : index
    %20 = vector.load %arg14[%c0_13, %c0_14] : memref<16x18xf32, #tpu.memory_space<vmem>>, vector<16x2xf32>
    tpu.vector_store %arg14[%c0_13, %c0_14], %19 {strides = array<i32>} : memref<16x18xf32, #tpu.memory_space<vmem>>, vector<16x2xf32>,
    %c0_15 = arith.constant 0 : index
    %c2 = arith.constant 2 : index
    %21 = vector.load %arg14[%c0_15, %c2] : memref<16x18xf32, #tpu.memory_space<vmem>>, vector<16x16xf32>
    tpu.vector_store %arg14[%c0_15, %c2], %18 {strides = array<i32>} : memref<16x18xf32, #tpu.memory_space<vmem>>, vector<16x16xf32>,
    %cst_16 = arith.constant 0.000000e+00 : f32
    %22 = vector.broadcast %cst_16 : f32 to vector<16x16xf32>
    %c0_17 = arith.constant 0 : index
    %c0_18 = arith.constant 0 : index
    %23 = vector.load %arg14[%c0_17, %c0_18] : memref<16x18xf32, #tpu.memory_space<vmem>>, vector<16x16xf32>
    %c0_19 = arith.constant 0 : index
    %c0_20 = arith.constant 0 : index
    %c0_21 = arith.constant 0 : index
    %24 = vector.load %arg5[%c0_19, %c0_20, %c0_21] : memref<3x16x1xf32, #tpu.memory_space<vmem>>, vector<1x16x1xf32>
    %25 = vector.shape_cast %24 : vector<1x16x1xf32> to vector<16x1xf32>
    %26 = vector.broadcast %25 : vector<16x1xf32> to vector<16x16xf32>
    %27 = arith.mulf %26, %23 : vector<16x16xf32>
    %28 = arith.addf %22, %27 : vector<16x16xf32>
    %c0_22 = arith.constant 0 : index
    %c1 = arith.constant 1 : index
    %29 = vector.load %arg14[%c0_22, %c1] : memref<16x18xf32, #tpu.memory_space<vmem>>, vector<16x16xf32>
    %c1_23 = arith.constant 1 : index
    %c0_24 = arith.constant 0 : index
    %c0_25 = arith.constant 0 : index
    %30 = vector.load %arg5[%c1_23, %c0_24, %c0_25] : memref<3x16x1xf32, #tpu.memory_space<vmem>>, vector<1x16x1xf32>
    %31 = vector.shape_cast %30 : vector<1x16x1xf32> to vector<16x1xf32>
    %32 = vector.broadcast %31 : vector<16x1xf32> to vector<16x16xf32>
    %33 = arith.mulf %32, %29 : vector<16x16xf32>
    %34 = arith.addf %28, %33 : vector<16x16xf32>
    %c0_26 = arith.constant 0 : index
    %c2_27 = arith.constant 2 : index
    %35 = vector.load %arg14[%c0_26, %c2_27] : memref<16x18xf32, #tpu.memory_space<vmem>>, vector<16x16xf32>
    %c2_28 = arith.constant 2 : index
    %c0_29 = arith.constant 0 : index
    %c0_30 = arith.constant 0 : index
    %36 = vector.load %arg5[%c2_28, %c0_29, %c0_30] : memref<3x16x1xf32, #tpu.memory_space<vmem>>, vector<1x16x1xf32>
    %37 = vector.shape_cast %36 : vector<1x16x1xf32> to vector<16x1xf32>
    %38 = vector.broadcast %37 : vector<16x1xf32> to vector<16x16xf32>
    %39 = arith.mulf %38, %35 : vector<16x16xf32>
    %40 = arith.addf %34, %39 : vector<16x16xf32>
    %c0_31 = arith.constant 0 : index
    %c0_32 = arith.constant 0 : index
    %41 = vector.load %arg6[%c0_31, %c0_32] : memref<16x1xf32, #tpu.memory_space<vmem>>, vector<16x1xf32>
    %42 = vector.broadcast %41 : vector<16x1xf32> to vector<16x16xf32>
    %43 = arith.mulf %40, %42 : vector<16x16xf32>
    %c0_33 = arith.constant 0 : index
    %c0_34 = arith.constant 0 : index
    %44 = vector.load %arg7[%c0_33, %c0_34] : memref<16x1xf32, #tpu.memory_space<vmem>>, vector<16x1xf32>
    %45 = vector.broadcast %44 : vector<16x1xf32> to vector<16x16xf32>
    %46 = arith.addf %43, %45 : vector<16x16xf32>
    %cst_35 = arith.constant 3.000000e+00 : f32
    %47 = vector.broadcast %cst_35 : f32 to vector<16x16xf32>
    %48 = arith.addf %46, %47 : vector<16x16xf32>
    %cst_36 = arith.constant 0.000000e+00 : f32
    %cst_37 = arith.constant 6.000000e+00 : f32
    %49 = vector.broadcast %cst_36 : f32 to vector<16x16xf32>
    %50 = arith.maximumf %49, %48 : vector<16x16xf32>
    %51 = vector.broadcast %cst_37 : f32 to vector<16x16xf32>
    %52 = arith.minimumf %51, %50 : vector<16x16xf32>
    %53 = arith.mulf %46, %52 : vector<16x16xf32>
    %cst_38 = arith.constant 0.166666672 : f32
    %54 = vector.broadcast %cst_38 : f32 to vector<16x16xf32>
    %55 = arith.mulf %53, %54 : vector<16x16xf32>
    %cst_39 = arith.constant dense<0.000000e+00> : vector<16xf32>
    %56 = vector.multi_reduction <add>, %55, %cst_39 [1] : vector<16x16xf32> to vector<16xf32>
    %57 = vector.shape_cast %56 : vector<16xf32> to vector<16x1xf32>
    %cst_40 = arith.constant 1.600000e+01 : f32
    %58 = vector.broadcast %cst_40 : f32 to vector<16x1xf32>
    %59 = arith.divf %57, %58 : vector<16x1xf32>
    %c0_41 = arith.constant 0 : index
    %c0_42 = arith.constant 0 : index
    %60 = vector.load %arg8[%c0_41, %c0_42] : memref<2x16xf32, #tpu.memory_space<vmem>>, vector<2x16xf32>
    %cst_43 = arith.constant dense<0.000000e+00> : vector<2x1xf32>
    %61 = tpu.matmul %60, %59, %cst_43 {dimension_numbers = #tpu.dot_dimension_numbers<[1], [0], [0], [1], [0, 0, 1, 1], [], []>} : vector<2x16xf32>, vector<16x1xf32>, vector<2x1xf32> -> vector<2x1xf32>
    %cst_44 = arith.constant 3.000000e+00 : f32
    %62 = vector.broadcast %cst_44 : f32 to vector<2x1xf32>
    %63 = arith.addf %61, %62 : vector<2x1xf32>
    %cst_45 = arith.constant 0.000000e+00 : f32
    %cst_46 = arith.constant 6.000000e+00 : f32
    %64 = vector.broadcast %cst_45 : f32 to vector<2x1xf32>
    %65 = arith.maximumf %64, %63 : vector<2x1xf32>
    %66 = vector.broadcast %cst_46 : f32 to vector<2x1xf32>
    %67 = arith.minimumf %66, %65 : vector<2x1xf32>
    %68 = arith.mulf %61, %67 : vector<2x1xf32>
    %cst_47 = arith.constant 0.166666672 : f32
    %69 = vector.broadcast %cst_47 : f32 to vector<2x1xf32>
    %70 = arith.mulf %68, %69 : vector<2x1xf32>
    %c0_48 = arith.constant 0 : index
    %c0_49 = arith.constant 0 : index
    %71 = vector.load %arg9[%c0_48, %c0_49] : memref<16x2xf32, #tpu.memory_space<vmem>>, vector<16x2xf32>
    %cst_50 = arith.constant dense<0.000000e+00> : vector<16x1xf32>
    %72 = tpu.matmul %71, %70, %cst_50 {dimension_numbers = #tpu.dot_dimension_numbers<[1], [0], [0], [1], [0, 0, 1, 1], [], []>} : vector<16x2xf32>, vector<2x1xf32>, vector<16x1xf32> -> vector<16x1xf32>
    %73 = arith.negf %72 : vector<16x1xf32>
    %74 = math.exp %73 : vector<16x1xf32>
    %cst_51 = arith.constant 1.000000e+00 : f32
    %75 = vector.broadcast %cst_51 : f32 to vector<16x1xf32>
    %76 = arith.addf %75, %74 : vector<16x1xf32>
    %77 = arith.divf %75, %76 : vector<16x1xf32>
    %78 = vector.broadcast %77 : vector<16x1xf32> to vector<16x16xf32>
    %79 = arith.mulf %55, %78 : vector<16x16xf32>
    %c0_52 = arith.constant 0 : index
    %c0_53 = arith.constant 0 : index
    %80 = vector.load %arg10[%c0_52, %c0_53] : memref<8x16xf32, #tpu.memory_space<vmem>>, vector<8x16xf32>
    %cst_54 = arith.constant dense<0.000000e+00> : vector<8x16xf32>
    %81 = tpu.matmul %80, %79, %cst_54 {dimension_numbers = #tpu.dot_dimension_numbers<[1], [0], [0], [1], [0, 0, 1, 1], [], []>} : vector<8x16xf32>, vector<16x16xf32>, vector<8x16xf32> -> vector<8x16xf32>
    %c0_55 = arith.constant 0 : index
    %c0_56 = arith.constant 0 : index
    %82 = vector.load %arg11[%c0_55, %c0_56] : memref<8x1xf32, #tpu.memory_space<vmem>>, vector<8x1xf32>
    %83 = vector.broadcast %82 : vector<8x1xf32> to vector<8x16xf32>
    %84 = arith.mulf %81, %83 : vector<8x16xf32>
    %c0_57 = arith.constant 0 : index
    %c0_58 = arith.constant 0 : index
    %85 = vector.load %arg12[%c0_57, %c0_58] : memref<8x1xf32, #tpu.memory_space<vmem>>, vector<8x1xf32>
    %86 = vector.broadcast %85 : vector<8x1xf32> to vector<8x16xf32>
    %87 = arith.addf %84, %86 : vector<8x16xf32>
    %88 = arith.addf %87, %1 : vector<8x16xf32>
    %c0_59 = arith.constant 0 : index
    %c0_60 = arith.constant 0 : index
    %c0_61 = arith.constant 0 : index
    %89 = vector.load %arg13[%c0_59, %c0_60, %c0_61] : memref<1x8x16xf32, #tpu.memory_space<vmem>>, vector<1x8x16xf32>
    %90 = vector.shape_cast %89 : vector<1x8x16xf32> to vector<8x16xf32>
    %91 = vector.shape_cast %88 : vector<8x16xf32> to vector<1x8x16xf32>
    tpu.vector_store %arg13[%c0_59, %c0_60, %c0_61], %91 {strides = array<i32>} : memref<1x8x16xf32, #tpu.memory_space<vmem>>, vector<1x8x16xf32>,
    return
  }
  func.func @transform_0(%arg0: i32) -> (i32, i32, i32) {
    %c0_i32 = arith.constant 0 : i32
    %c0_i32_0 = arith.constant 0 : i32
    %c0_i32_1 = arith.constant 0 : i32
    return %arg0, %c0_i32, %c0_i32_0 : i32, i32, i32
  }
  func.func @transform_1(%arg0: i32) -> (i32, i32) {
    %c0_i32 = arith.constant 0 : i32
    %c0_i32_0 = arith.constant 0 : i32
    %c0_i32_1 = arith.constant 0 : i32
    return %c0_i32, %c0_i32_0 : i32, i32
  }
  func.func @transform_2(%arg0: i32) -> (i32, i32) {
    %c0_i32 = arith.constant 0 : i32
    %c0_i32_0 = arith.constant 0 : i32
    %c0_i32_1 = arith.constant 0 : i32
    return %c0_i32, %c0_i32_0 : i32, i32
  }
  func.func @transform_3(%arg0: i32) -> (i32, i32) {
    %c0_i32 = arith.constant 0 : i32
    %c0_i32_0 = arith.constant 0 : i32
    %c0_i32_1 = arith.constant 0 : i32
    return %c0_i32, %c0_i32_0 : i32, i32
  }
  func.func @transform_4(%arg0: i32) -> (i32, i32, i32) {
    %c0_i32 = arith.constant 0 : i32
    %c0_i32_0 = arith.constant 0 : i32
    %c0_i32_1 = arith.constant 0 : i32
    %c0_i32_2 = arith.constant 0 : i32
    return %c0_i32, %c0_i32_0, %c0_i32_1 : i32, i32, i32
  }
  func.func @transform_5(%arg0: i32) -> (i32, i32) {
    %c0_i32 = arith.constant 0 : i32
    %c0_i32_0 = arith.constant 0 : i32
    %c0_i32_1 = arith.constant 0 : i32
    return %c0_i32, %c0_i32_0 : i32, i32
  }
  func.func @transform_6(%arg0: i32) -> (i32, i32) {
    %c0_i32 = arith.constant 0 : i32
    %c0_i32_0 = arith.constant 0 : i32
    %c0_i32_1 = arith.constant 0 : i32
    return %c0_i32, %c0_i32_0 : i32, i32
  }
  func.func @transform_7(%arg0: i32) -> (i32, i32) {
    %c0_i32 = arith.constant 0 : i32
    %c0_i32_0 = arith.constant 0 : i32
    %c0_i32_1 = arith.constant 0 : i32
    return %c0_i32, %c0_i32_0 : i32, i32
  }
  func.func @transform_8(%arg0: i32) -> (i32, i32) {
    %c0_i32 = arith.constant 0 : i32
    %c0_i32_0 = arith.constant 0 : i32
    %c0_i32_1 = arith.constant 0 : i32
    return %c0_i32, %c0_i32_0 : i32, i32
  }
  func.func @transform_9(%arg0: i32) -> (i32, i32) {
    %c0_i32 = arith.constant 0 : i32
    %c0_i32_0 = arith.constant 0 : i32
    %c0_i32_1 = arith.constant 0 : i32
    return %c0_i32, %c0_i32_0 : i32, i32
  }
  func.func @transform_10(%arg0: i32) -> (i32, i32) {
    %c0_i32 = arith.constant 0 : i32
    %c0_i32_0 = arith.constant 0 : i32
    %c0_i32_1 = arith.constant 0 : i32
    return %c0_i32, %c0_i32_0 : i32, i32
  }
  func.func @transform_11(%arg0: i32) -> (i32, i32) {
    %c0_i32 = arith.constant 0 : i32
    %c0_i32_0 = arith.constant 0 : i32
    %c0_i32_1 = arith.constant 0 : i32
    return %c0_i32, %c0_i32_0 : i32, i32
  }
  func.func @transform_12(%arg0: i32) -> (i32, i32, i32) {
    %c0_i32 = arith.constant 0 : i32
    %c0_i32_0 = arith.constant 0 : i32
    %c0_i32_1 = arith.constant 0 : i32
    return %arg0, %c0_i32, %c0_i32_0 : i32, i32, i32
  }
}

</mosaic_0001>

<llo_original>
// kernel: tpu_custom_call.1
$region0: #{tpu_custom_call.1}
  #allocation0 [shape = 'u32[]', space=smem, size = 0x4, offset = 0x4, fixed_abs, tag = 'smem constant byte address 0x4 - core index']
  #allocation1 [shape = 'u32[72,128]{1,0:T(1,128)}', space=vmem, size = 0x9000, scoped, tag = 'internal scratch']
  #allocation2 [shape = 'f32[16,18]{1,0:T(8,128)}', space=vmem, size = 0x2000, scoped, tag = 'scratch operand']
  %s0 = inlined_call_operand.vmem [shape: f32[2,8,16], index: 0, kind: input, shape index: {}]
  %s1 = inlined_call_operand.vmem [shape: f32[16,8], index: 1, kind: input, shape index: {}]
  %s2 = inlined_call_operand.vmem [shape: f32[16,1], index: 2, kind: input, shape index: {}]
  %s3 = inlined_call_operand.vmem [shape: f32[16,1], index: 3, kind: input, shape index: {}]
  %s4 = inlined_call_operand.vmem [shape: f32[3,16,1], index: 4, kind: input, shape index: {}]
  %s5 = inlined_call_operand.vmem [shape: f32[16,1], index: 5, kind: input, shape index: {}]
  %s6 = inlined_call_operand.vmem [shape: f32[16,1], index: 6, kind: input, shape index: {}]
  %s7 = inlined_call_operand.vmem [shape: f32[2,16], index: 7, kind: input, shape index: {}]
  %s8 = inlined_call_operand.vmem [shape: f32[16,2], index: 8, kind: input, shape index: {}]
  %s9 = inlined_call_operand.vmem [shape: f32[8,16], index: 9, kind: input, shape index: {}]
  %s10 = inlined_call_operand.vmem [shape: f32[8,1], index: 10, kind: input, shape index: {}]
  %s11 = inlined_call_operand.vmem [shape: f32[8,1], index: 11, kind: input, shape index: {}]
  %s12 = inlined_call_operand.hbm [shape: f32[2,8,16], index: 12, kind: output, shape index: {}]
  %s13 = sld [smem:[#allocation0]]
  $region81: #{tpu_custom_call.1} parent=0
    _
  %s15 = ssub.s32 1, %s13
  %s16 = scalar_select 0, %s15, %s13
  $region1: #{tpu_custom_call.1} parent=0
    #allocation3 [shape = 'u8[8192]{0}', space=vmem, size = 0x2000, scoped, tag = 'output window, operand 0']
    #allocation4 [shape = 's32[2]{0}', space=sflag, size = 0x8, scoped, tag = 'scoped memory for tpu_custom_call.1']
    %17 = vsyncpa [#allocation4], 0
    %s18 = scalar_lea.sflag [#allocation4], 1
    %19 = vsyncpa %s18, 0
    loop: start=0, step=1, limit=4
    $region2: #{tpu_custom_call.1} parent=1 // loop_pre_header
      _
    $region3: #{tpu_custom_call.1} parent=1 // loop_header
      %s21 = sphi 0, %s25
      %p22 = scmp.ge.s32.totalorder %s21, 4
      %s31 = sphi 0, %s33
      %s34 = sphi 0, %s31
      %s35 = sphi 0, %s34
      %s51 = sphi 0, %s35
      %s55 = sphi 0, %s55
      %s57 = sphi 0, %s55
      %s58 = sphi 0, %s57
      %s72 = sphi 0, %s58
      %s76 = sphi 0, %s76
      %s78 = sphi 0, %s76
      %s79 = sphi 0, %s78
      %s93 = sphi 0, %s79
      %s97 = sphi 0, %s97
      %s99 = sphi 0, %s97
      %s100 = sphi 0, %s99
      %s114 = sphi 0, %s100
      %s118 = sphi 0, %s118
      %s120 = sphi 0, %s118
      %s121 = sphi 0, %s120
      %s135 = sphi 0, %s121
      %s139 = sphi 0, %s139
      %s141 = sphi 0, %s139
      %s142 = sphi 0, %s141
      %s156 = sphi 0, %s142
      %s160 = sphi 0, %s160
      %s162 = sphi 0, %s160
      %s163 = sphi 0, %s162
      %s177 = sphi 0, %s163
      %s181 = sphi 0, %s181
      %s183 = sphi 0, %s181
      %s184 = sphi 0, %s183
      %s198 = sphi 0, %s184
      %s202 = sphi 0, %s202
      %s204 = sphi 0, %s202
      %s205 = sphi 0, %s204
      %s219 = sphi 0, %s205
      %s223 = sphi 0, %s223
      %s225 = sphi 0, %s223
      %s226 = sphi 0, %s225
      %s240 = sphi 0, %s226
      %s244 = sphi 0, %s244
      %s246 = sphi 0, %s244
      %s247 = sphi 0, %s246
      %s261 = sphi 0, %s247
      %s265 = sphi 0, %s265
      %s267 = sphi 0, %s265
      %s268 = sphi 0, %s267
      %s282 = sphi 0, %s268
      %s288 = sphi 0, %s290
      %s291 = sphi 0, %s288
      %s292 = sphi 0, %s291
      %s308 = sphi 0, %s292
    $region4: #{tpu_custom_call.1} parent=1 // loop_header_branch
      %24 = sbr.rel (%p22) target = $region8
    $region5: #{tpu_custom_call.1} parent=1 // loop_body
      %s26 = ssub.s32 %s21, 1
      %s27 = ssub.s32 %s21, 2
      %s28 = sadd.s32 %s21, 1
      %s29 = ssub.s32 %s21, %s28
      %p30 = scmp.eq.s32.totalorder %s29, 0
      %s32 = sadd.s32 %s31, 1
      %s33 = scalar_select %p30, %s31, %s32
      %p36 = pneg %p30
      %p37 = scmp.eq.s32.totalorder %s21, 1
      %p38 = por %p36, %p37
      %p39 = scmp.ne.s32.totalorder %s31, %s34
      %p40 = scmp.eq.s32.totalorder %s21, 0
      %p41 = por %p39, %p40
      %p42 = scmp.ne.s32.totalorder %s31, %s34
      %p43 = scmp.eq.s32.totalorder %s26, 1
      %p44 = por %p42, %p43
      %p45 = scmp.ne.s32.totalorder %s34, %s35
      %p46 = scmp.eq.s32.totalorder %s26, 0
      %p47 = por %p45, %p46
      %p48 = scmp.ne.s32.totalorder %s34, %s35
      %p49 = scmp.eq.s32.totalorder %s27, 1
      %p50 = por %p48, %p49
      %p52 = scmp.ne.s32.totalorder %s35, %s51
      %p53 = scmp.eq.s32.totalorder %s27, 0
      %p54 = por %p52, %p53
      %s56 = sadd.s32 %s55, 1
      %p59 = scmp.eq.s32.totalorder %s21, 1
      %p60 = scmp.ne.s32.totalorder %s55, %s57
      %p61 = scmp.eq.s32.totalorder %s21, 0
      %p62 = por %p60, %p61
      %p63 = scmp.ne.s32.totalorder %s55, %s57
      %p64 = scmp.eq.s32.totalorder %s26, 1
      %p65 = por %p63, %p64
      %p66 = scmp.ne.s32.totalorder %s57, %s58
      %p67 = scmp.eq.s32.totalorder %s26, 0
      %p68 = por %p66, %p67
      %p69 = scmp.ne.s32.totalorder %s57, %s58
      %p70 = scmp.eq.s32.totalorder %s27, 1
      %p71 = por %p69, %p70
      %p73 = scmp.ne.s32.totalorder %s58, %s72
      %p74 = scmp.eq.s32.totalorder %s27, 0
      %p75 = por %p73, %p74
      %s77 = sadd.s32 %s76, 1
      %p80 = scmp.eq.s32.totalorder %s21, 1
      %p81 = scmp.ne.s32.totalorder %s76, %s78
      %p82 = scmp.eq.s32.totalorder %s21, 0
      %p83 = por %p81, %p82
      %p84 = scmp.ne.s32.totalorder %s76, %s78
      %p85 = scmp.eq.s32.totalorder %s26, 1
      %p86 = por %p84, %p85
      %p87 = scmp.ne.s32.totalorder %s78, %s79
      %p88 = scmp.eq.s32.totalorder %s26, 0
      %p89 = por %p87, %p88
      %p90 = scmp.ne.s32.totalorder %s78, %s79
      %p91 = scmp.eq.s32.totalorder %s27, 1
      %p92 = por %p90, %p91
      %p94 = scmp.ne.s32.totalorder %s79, %s93
      %p95 = scmp.eq.s32.totalorder %s27, 0
      %p96 = por %p94, %p95
      %s98 = sadd.s32 %s97, 1
      %p101 = scmp.eq.s32.totalorder %s21, 1
      %p102 = scmp.ne.s32.totalorder %s97, %s99
      %p103 = scmp.eq.s32.totalorder %s21, 0
      %p104 = por %p102, %p103
      %p105 = scmp.ne.s32.totalorder %s97, %s99
      %p106 = scmp.eq.s32.totalorder %s26, 1
      %p107 = por %p105, %p106
      %p108 = scmp.ne.s32.totalorder %s99, %s100
      %p109 = scmp.eq.s32.totalorder %s26, 0
      %p110 = por %p108, %p109
      %p111 = scmp.ne.s32.totalorder %s99, %s100
      %p112 = scmp.eq.s32.totalorder %s27, 1
      %p113 = por %p111, %p112
      %p115 = scmp.ne.s32.totalorder %s100, %s114
      %p116 = scmp.eq.s32.totalorder %s27, 0
      %p117 = por %p115, %p116
      %s119 = sadd.s32 %s118, 1
      %p122 = scmp.eq.s32.totalorder %s21, 1
      %p123 = scmp.ne.s32.totalorder %s118, %s120
      %p124 = scmp.eq.s32.totalorder %s21, 0
      %p125 = por %p123, %p124
      %p126 = scmp.ne.s32.totalorder %s118, %s120
      %p127 = scmp.eq.s32.totalorder %s26, 1
      %p128 = por %p126, %p127
      %p129 = scmp.ne.s32.totalorder %s120, %s121
      %p130 = scmp.eq.s32.totalorder %s26, 0
      %p131 = por %p129, %p130
      %p132 = scmp.ne.s32.totalorder %s120, %s121
      %p133 = scmp.eq.s32.totalorder %s27, 1
      %p134 = por %p132, %p133
      %p136 = scmp.ne.s32.totalorder %s121, %s135
      %p137 = scmp.eq.s32.totalorder %s27, 0
      %p138 = por %p136, %p137
      %s140 = sadd.s32 %s139, 1
      %p143 = scmp.eq.s32.totalorder %s21, 1
      %p144 = scmp.ne.s32.totalorder %s139, %s141
      %p145 = scmp.eq.s32.totalorder %s21, 0
      %p146 = por %p144, %p145
      %p147 = scmp.ne.s32.totalorder %s139, %s141
      %p148 = scmp.eq.s32.totalorder %s26, 1
      %p149 = por %p147, %p148
      %p150 = scmp.ne.s32.totalorder %s141, %s142
      %p151 = scmp.eq.s32.totalorder %s26, 0
      %p152 = por %p150, %p151
      %p153 = scmp.ne.s32.totalorder %s141, %s142
      %p154 = scmp.eq.s32.totalorder %s27, 1
      %p155 = por %p153, %p154
      %p157 = scmp.ne.s32.totalorder %s142, %s156
      %p158 = scmp.eq.s32.totalorder %s27, 0
      %p159 = por %p157, %p158
      %s161 = sadd.s32 %s160, 1
      %p164 = scmp.eq.s32.totalorder %s21, 1
      %p165 = scmp.ne.s32.totalorder %s160, %s162
      %p166 = scmp.eq.s32.totalorder %s21, 0
      %p167 = por %p165, %p166
      %p168 = scmp.ne.s32.totalorder %s160, %s162
      %p169 = scmp.eq.s32.totalorder %s26, 1
      %p170 = por %p168, %p169
      %p171 = scmp.ne.s32.totalorder %s162, %s163
      %p172 = scmp.eq.s32.totalorder %s26, 0
      %p173 = por %p171, %p172
      %p174 = scmp.ne.s32.totalorder %s162, %s163
      %p175 = scmp.eq.s32.totalorder %s27, 1
      %p176 = por %p174, %p175
      %p178 = scmp.ne.s32.totalorder %s163, %s177
      %p179 = scmp.eq.s32.totalorder %s27, 0
      %p180 = por %p178, %p179
      %s182 = sadd.s32 %s181, 1
      %p185 = scmp.eq.s32.totalorder %s21, 1
      %p186 = scmp.ne.s32.totalorder %s181, %s183
      %p187 = scmp.eq.s32.totalorder %s21, 0
      %p188 = por %p186, %p187
      %p189 = scmp.ne.s32.totalorder %s181, %s183
      %p190 = scmp.eq.s32.totalorder %s26, 1
      %p191 = por %p189, %p190
      %p192 = scmp.ne.s32.totalorder %s183, %s184
      %p193 = scmp.eq.s32.totalorder %s26, 0
      %p194 = por %p192, %p193
      %p195 = scmp.ne.s32.totalorder %s183, %s184
      %p196 = scmp.eq.s32.totalorder %s27, 1
      %p197 = por %p195, %p196
      %p199 = scmp.ne.s32.totalorder %s184, %s198
      %p200 = scmp.eq.s32.totalorder %s27, 0
      %p201 = por %p199, %p200
      %s203 = sadd.s32 %s202, 1
      %p206 = scmp.eq.s32.totalorder %s21, 1
      %p207 = scmp.ne.s32.totalorder %s202, %s204
      %p208 = scmp.eq.s32.totalorder %s21, 0
      %p209 = por %p207, %p208
      %p210 = scmp.ne.s32.totalorder %s202, %s204
      %p211 = scmp.eq.s32.totalorder %s26, 1
      %p212 = por %p210, %p211
      %p213 = scmp.ne.s32.totalorder %s204, %s205
      %p214 = scmp.eq.s32.totalorder %s26, 0
      %p215 = por %p213, %p214
      %p216 = scmp.ne.s32.totalorder %s204, %s205
      %p217 = scmp.eq.s32.totalorder %s27, 1
      %p218 = por %p216, %p217
      %p220 = scmp.ne.s32.totalorder %s205, %s219
      %p221 = scmp.eq.s32.totalorder %s27, 0
      %p222 = por %p220, %p221
      %s224 = sadd.s32 %s223, 1
      %p227 = scmp.eq.s32.totalorder %s21, 1
      %p228 = scmp.ne.s32.totalorder %s223, %s225
      %p229 = scmp.eq.s32.totalorder %s21, 0
      %p230 = por %p228, %p229
      %p231 = scmp.ne.s32.totalorder %s223, %s225
      %p232 = scmp.eq.s32.totalorder %s26, 1
      %p233 = por %p231, %p232
      %p234 = scmp.ne.s32.totalorder %s225, %s226
      %p235 = scmp.eq.s32.totalorder %s26, 0
      %p236 = por %p234, %p235
      %p237 = scmp.ne.s32.totalorder %s225, %s226
      %p238 = scmp.eq.s32.totalorder %s27, 1
      %p239 = por %p237, %p238
      %p241 = scmp.ne.s32.totalorder %s226, %s240
      %p242 = scmp.eq.s32.totalorder %s27, 0
      %p243 = por %p241, %p242
      %s245 = sadd.s32 %s244, 1
      %p248 = scmp.eq.s32.totalorder %s21, 1
      %p249 = scmp.ne.s32.totalorder %s244, %s246
      %p250 = scmp.eq.s32.totalorder %s21, 0
      %p251 = por %p249, %p250
      %p252 = scmp.ne.s32.totalorder %s244, %s246
      %p253 = scmp.eq.s32.totalorder %s26, 1
      %p254 = por %p252, %p253
      %p255 = scmp.ne.s32.totalorder %s246, %s247
      %p256 = scmp.eq.s32.totalorder %s26, 0
      %p257 = por %p255, %p256
      %p258 = scmp.ne.s32.totalorder %s246, %s247
      %p259 = scmp.eq.s32.totalorder %s27, 1
      %p260 = por %p258, %p259
      %p262 = scmp.ne.s32.totalorder %s247, %s261
      %p263 = scmp.eq.s32.totalorder %s27, 0
      %p264 = por %p262, %p263
      %s266 = sadd.s32 %s265, 1
      %p269 = scmp.eq.s32.totalorder %s21, 1
      %p270 = scmp.ne.s32.totalorder %s265, %s267
      %p271 = scmp.eq.s32.totalorder %s21, 0
      %p272 = por %p270, %p271
      %p273 = scmp.ne.s32.totalorder %s265, %s267
      %p274 = scmp.eq.s32.totalorder %s26, 1
      %p275 = por %p273, %p274
      %p276 = scmp.ne.s32.totalorder %s267, %s268
      %p277 = scmp.eq.s32.totalorder %s26, 0
      %p278 = por %p276, %p277
      %p279 = scmp.ne.s32.totalorder %s267, %s268
      %p280 = scmp.eq.s32.totalorder %s27, 1
      %p281 = por %p279, %p280
      %p283 = scmp.ne.s32.totalorder %s268, %s282
      %p284 = scmp.eq.s32.totalorder %s27, 0
      %p285 = por %p283, %p284
      %s286 = ssub.s32 %s21, %s28
      %p287 = scmp.eq.s32.totalorder %s286, 0
      %s289 = sadd.s32 %s288, 1
      %s290 = scalar_select %p287, %s288, %s289
      %p293 = pneg %p287
      %p294 = scmp.eq.s32.totalorder %s21, 1
      %p295 = por %p293, %p294
      %p296 = scmp.ne.s32.totalorder %s288, %s291
      %p297 = scmp.eq.s32.totalorder %s21, 0
      %p298 = por %p296, %p297
      %p299 = scmp.ne.s32.totalorder %s288, %s291
      %p300 = scmp.eq.s32.totalorder %s26, 1
      %p301 = por %p299, %p300
      %p302 = scmp.ne.s32.totalorder %s291, %s292
      %p303 = scmp.eq.s32.totalorder %s26, 0
      %p304 = por %p302, %p303
      %p305 = scmp.ne.s32.totalorder %s291, %s292
      %p306 = scmp.eq.s32.totalorder %s27, 1
      %p307 = por %p305, %p306
      %p309 = scmp.ne.s32.totalorder %s292, %s308
      %p310 = scmp.eq.s32.totalorder %s27, 0
      %p311 = por %p309, %p310
      %p312 = scmp.le.s32.totalorder 1, %s21
      %p313 = scmp.lt.s32.totalorder %s21, 3
      %p314 = pnand %p312, %p313
      %p315 = pneg %p314
      // Predicated region
      $region9: #{tpu_custom_call.1} parent=5 // pred_check
        _
      $region10: #{tpu_custom_call.1} parent=5 // pred_check_branch
        %317 = sbr.rel (%p314) target = $region12
      $region11: #{tpu_custom_call.1} parent=5 // pred_region
        %s318 = ssub.s32 %s21, 1
        // Predicated region
        $region13: #{tpu_custom_call.1} parent=11 // pred_check
          %p319 = pneg %p68
        $region14: #{tpu_custom_call.1} parent=11 // pred_check_branch
          %321 = sbr.rel (%p319) target = $region16
        $region15: #{tpu_custom_call.1} parent=11 // pred_region
          _
        $region16: #{tpu_custom_call.1} parent=11 // pred_fallthru
          _
        // Predicated region
        $region17: #{tpu_custom_call.1} parent=11 // pred_check
          %p322 = pneg %p89
        $region18: #{tpu_custom_call.1} parent=11 // pred_check_branch
          %324 = sbr.rel (%p322) target = $region20
        $region19: #{tpu_custom_call.1} parent=11 // pred_region
          _
        $region20: #{tpu_custom_call.1} parent=11 // pred_fallthru
          _
        // Predicated region
        $region21: #{tpu_custom_call.1} parent=11 // pred_check
          %p325 = pneg %p110
        $region22: #{tpu_custom_call.1} parent=11 // pred_check_branch
          %327 = sbr.rel (%p325) target = $region24
        $region23: #{tpu_custom_call.1} parent=11 // pred_region
          _
        $region24: #{tpu_custom_call.1} parent=11 // pred_fallthru
          _
        // Predicated region
        $region25: #{tpu_custom_call.1} parent=11 // pred_check
          %p328 = pneg %p131
        $region26: #{tpu_custom_call.1} parent=11 // pred_check_branch
          %330 = sbr.rel (%p328) target = $region28
        $region27: #{tpu_custom_call.1} parent=11 // pred_region
          _
        $region28: #{tpu_custom_call.1} parent=11 // pred_fallthru
          _
        // Predicated region
        $region29: #{tpu_custom_call.1} parent=11 // pred_check
          %p331 = pneg %p152
        $region30: #{tpu_custom_call.1} parent=11 // pred_check_branch
          %333 = sbr.rel (%p331) target = $region32
        $region31: #{tpu_custom_call.1} parent=11 // pred_region
          _
        $region32: #{tpu_custom_call.1} parent=11 // pred_fallthru
          _
        // Predicated region
        $region33: #{tpu_custom_call.1} parent=11 // pred_check
          %p334 = pneg %p173
        $region34: #{tpu_custom_call.1} parent=11 // pred_check_branch
          %336 = sbr.rel (%p334) target = $region36
        $region35: #{tpu_custom_call.1} parent=11 // pred_region
          _
        $region36: #{tpu_custom_call.1} parent=11 // pred_fallthru
          _
        // Predicated region
        $region37: #{tpu_custom_call.1} parent=11 // pred_check
          %p337 = pneg %p194
        $region38: #{tpu_custom_call.1} parent=11 // pred_check_branch
          %339 = sbr.rel (%p337) target = $region40
        $region39: #{tpu_custom_call.1} parent=11 // pred_region
          _
        $region40: #{tpu_custom_call.1} parent=11 // pred_fallthru
          _
        // Predicated region
        $region41: #{tpu_custom_call.1} parent=11 // pred_check
          %p340 = pneg %p215
        $region42: #{tpu_custom_call.1} parent=11 // pred_check_branch
          %342 = sbr.rel (%p340) target = $region44
        $region43: #{tpu_custom_call.1} parent=11 // pred_region
          _
        $region44: #{tpu_custom_call.1} parent=11 // pred_fallthru
          _
        // Predicated region
        $region45: #{tpu_custom_call.1} parent=11 // pred_check
          %p343 = pneg %p236
        $region46: #{tpu_custom_call.1} parent=11 // pred_check_branch
          %345 = sbr.rel (%p343) target = $region48
        $region47: #{tpu_custom_call.1} parent=11 // pred_region
          _
        $region48: #{tpu_custom_call.1} parent=11 // pred_fallthru
          _
        // Predicated region
        $region49: #{tpu_custom_call.1} parent=11 // pred_check
          %p346 = pneg %p257
        $region50: #{tpu_custom_call.1} parent=11 // pred_check_branch
          %348 = sbr.rel (%p346) target = $region52
        $region51: #{tpu_custom_call.1} parent=11 // pred_region
          _
        $region52: #{tpu_custom_call.1} parent=11 // pred_fallthru
          _
        // Predicated region
        $region53: #{tpu_custom_call.1} parent=11 // pred_check
          %p349 = pneg %p278
        $region54: #{tpu_custom_call.1} parent=11 // pred_check_branch
          %351 = sbr.rel (%p349) target = $region56
        $region55: #{tpu_custom_call.1} parent=11 // pred_region
          _
        $region56: #{tpu_custom_call.1} parent=11 // pred_fallthru
          _
      $region12: #{tpu_custom_call.1} parent=5 // pred_fallthru
        _
      %p352 = scmp.lt.s32.totalorder %s21, 2
      // Predicated region
      $region57: #{tpu_custom_call.1} parent=5 // pred_check
        %p353 = pneg %p352
      $region58: #{tpu_custom_call.1} parent=5 // pred_check_branch
        %355 = sbr.rel (%p353) target = $region60
      $region59: #{tpu_custom_call.1} parent=5 // pred_region
        // Predicated region
        $region61: #{tpu_custom_call.1} parent=59 // pred_check
          %p356 = pneg %p41
        $region62: #{tpu_custom_call.1} parent=59 // pred_check_branch
          %358 = sbr.rel (%p356) target = $region64
        $region63: #{tpu_custom_call.1} parent=59 // pred_region
          %p359 = scmp.lt.s32.totalorder %s21, 1
          %s360 = scalar_select %p359, %s21, 1
          %s361 = smul.addr %s360, 8
          %s362 = scalar_lea.vmem %s0, %s361
        $region64: #{tpu_custom_call.1} parent=59 // pred_fallthru
          _
      $region60: #{tpu_custom_call.1} parent=5 // pred_fallthru
        _
      %p363 = scmp.le.s32.totalorder 1, %s21
      %p364 = scmp.lt.s32.totalorder %s21, 3
      %p365 = pnand %p363, %p364
      %p366 = pneg %p365
      // Predicated region
      $region65: #{tpu_custom_call.1} parent=5 // pred_check
        _
      $region66: #{tpu_custom_call.1} parent=5 // pred_check_branch
        %368 = sbr.rel (%p365) target = $region68
      $region67: #{tpu_custom_call.1} parent=5 // pred_region
        %s369 = ssub.s32 %s21, 1
        %p370 = scmp.lt.s32.totalorder %s26, 1
        %s371 = scalar_select %p370, %s26, 1
        %s372 = smul.addr %s371, 8
        %s373 = scalar_lea.vmem %s0, %s372
        %p374 = pneg %p47
        %p375 = pneg %p44
        %p376 = pneg %p68
        %p377 = pneg %p65
        %p378 = pneg %p89
        %p379 = pneg %p86
        %p380 = pneg %p110
        %p381 = pneg %p107
        %p382 = pneg %p131
        %p383 = pneg %p128
        %p384 = pneg %p152
        %p385 = pneg %p149
        %p386 = pneg %p173
        %p387 = pneg %p170
        %p388 = pneg %p194
        %p389 = pneg %p191
        %p390 = pneg %p215
        %p391 = pneg %p212
        %p392 = pneg %p236
        %p393 = pneg %p233
        %p394 = pneg %p257
        %p395 = pneg %p254
        %p396 = pneg %p278
        %p397 = pneg %p275
        %p398 = pneg %p304
        %p399 = pneg %p301
        %s400 = sand.u32 %s291, 1
        %s401 = scalar_lea.sflag [#allocation4], %s400
        %s402 = sand.u32 %s291, 1
        %s403 = smul.addr %s402, 8
        %s404 = scalar_lea.vmem [#allocation3], %s403
        %p405 = scmp.lt.s32.totalorder %s26, 1
        %s406 = scalar_select %p405, %s26, 1
        %s407 = smul.addr %s406, 8
        %s408 = scalar_lea.vmem %s0, %s407
        %v409 = vld [vmem:[%s408] sm:$0xff]
        %v410 = vld [vmem:[%s1] sm:$0xff]
        %v411 = vld [vmem:[%s1 + $0x8] sm:$0xff]
        %vm412 = vcmask 64512
        %v414 = vsel %vm412, %v410, 0
        %v417 = vsel %vm412, %v411, 0
        %419 = vmatpush.msra.mxu0 0.0
        %420 = vmatpush.msra.mxu0 0.0
        %421 = vmatpush.msra.mxu0 0.0
        %422 = vmatpush.msra.mxu0 0.0
        %423 = vmatpush.msra.mxu0 0.0
        %424 = vmatpush.msra.mxu0 0.0
        %425 = vmatpush.msra.mxu0 0.0
        %426 = vmatpush.msra.mxu0 0.0
        %427 = vmatpush.msra.mxu0 0.0
        %428 = vmatpush.msra.mxu0 0.0
        %429 = vmatpush.msra.mxu0 0.0
        %430 = vmatpush.msra.mxu0 0.0
        %431 = vmatpush.msra.mxu0 0.0
        %432 = vmatpush.msra.mxu0 0.0
        %433 = vmatpush.msra.mxu0 0.0
        %434 = vmatpush.msra.mxu0 %v409
        %435 = vmatmul.f32.gmra.mxu0 %v414
        %v436 = vpop.f32.mrf.mxu0
        %v437 = vadd.f32 0.0, %v436
        %438 = vmatmul.f32.gmra.mxu0 %v417
        %v439 = vpop.f32.mrf.mxu0
        %v440 = vadd.f32 0.0, %v439
        %441 = vdwg.mxu0
        %v442 = vld [vmem:[%s2] sm:$0xff]
        %v443 = vld [vmem:[%s2 + $0x8] sm:$0xff]
        %445 = vset.pattern.permute.xlu0 0
        %446 = vperm.xlu0 %445, %v442
        %v447 = vpop.permute.xlu0 %446
        %450 = vset.pattern.permute.xlu0 0
        %451 = vperm.xlu0 %450, %v443
        %v452 = vpop.permute.xlu0 %451
        %v454 = vmul.f32 %v437, %v447
        %v455 = vmul.f32 %v440, %v452
        %v456 = vld [vmem:[%s3] sm:$0xff]
        %v457 = vld [vmem:[%s3 + $0x8] sm:$0xff]
        %459 = vset.pattern.permute.xlu0 0
        %460 = vperm.xlu0 %459, %v456
        %v461 = vpop.permute.xlu0 %460
        %464 = vset.pattern.permute.xlu0 0
        %465 = vperm.xlu0 %464, %v457
        %v466 = vpop.permute.xlu0 %465
        %v468 = vadd.f32 %v454, %v461
        %v469 = vadd.f32 %v455, %v466
        %v470 = vadd.f32 %v468, 3.0
        %v471 = vadd.f32 %v469, 3.0
        %v472 = vmax.f32 %v470, 0.0
        %v473 = vmax.f32 %v471, 0.0
        %v474 = vmin.f32 %v472, 6.0
        %v475 = vmin.f32 %v473, 6.0
        %v476 = vmul.f32 %v468, %v474
        %v477 = vmul.f32 %v469, %v475
        %v478 = vmul.f32 %v476, 0.16666667
        %v479 = vmul.f32 %v477, 0.16666667
        %vm480 = vcmask 15360
        %481 = vst.msk [vmem:[#allocation2] sm:$0xff] %vm480, 0.0
        %482 = vst.msk [vmem:[#allocation2 + $0x8] sm:$0xff] %vm480, 0.0
        %485 = vrot.lane.b32.xlu0 %v478, 2
        %v486 = vpop.permute.xlu0 %485
        %487 = vrot.lane.b32.xlu0 %v479, 2
        %v488 = vpop.permute.xlu0 %487
        %vm491 = vcmask 146448
        %492 = vst.msk [vmem:[#allocation2] sm:$0xff] %vm491, %v486
        %493 = vst.msk [vmem:[#allocation2 + $0x8] sm:$0xff] %vm491, %v488
        %v494 = vld [vmem:[#allocation2] sm:$0xff]
        %v495 = vld [vmem:[#allocation2 + $0x8] sm:$0xff]
        %v496 = vld [vmem:[%s4] sm:$0xff]
        %v497 = vld [vmem:[%s4 + $0x8] sm:$0xff]
        %499 = vset.pattern.permute.xlu0 0
        %500 = vperm.xlu0 %499, %v496
        %v501 = vpop.permute.xlu0 %500
        %504 = vset.pattern.permute.xlu0 0
        %505 = vperm.xlu0 %504, %v497
        %v506 = vpop.permute.xlu0 %505
        %v508 = vmul.f32 %v501, %v494
        %v509 = vmul.f32 %v506, %v495
        %v510 = vadd.f32 %v508, 0.0
        %v511 = vadd.f32 %v509, 0.0
        %s512 = scalar_lea.vmem %s4, 16
        %v513 = vld [vmem:[%s512] sm:$0xff]
        %v514 = vld [vmem:[%s512 + $0x8] sm:$0xff]
        %516 = vset.pattern.permute.xlu0 0
        %517 = vperm.xlu0 %516, %v513
        %v518 = vpop.permute.xlu0 %517
        %521 = vset.pattern.permute.xlu0 0
        %522 = vperm.xlu0 %521, %v514
        %v523 = vpop.permute.xlu0 %522
        %v525 = vmul.f32 %v518, %v494
        %v526 = vmul.f32 %v523, %v495
        %529 = vrot.lane.b32.xlu0 %v525, 127
        %v530 = vpop.permute.xlu0 %529
        %531 = vrot.lane.b32.xlu0 %v526, 127
        %v532 = vpop.permute.xlu0 %531
        %v535 = vadd.f32 %v510, %v530
        %v536 = vadd.f32 %v511, %v532
        %s537 = scalar_lea.vmem %s4, 32
        %v538 = vld [vmem:[%s537] sm:$0xff]
        %v539 = vld [vmem:[%s537 + $0x8] sm:$0xff]
        %541 = vset.pattern.permute.xlu0 0
        %542 = vperm.xlu0 %541, %v538
        %v543 = vpop.permute.xlu0 %542
        %546 = vset.pattern.permute.xlu0 0
        %547 = vperm.xlu0 %546, %v539
        %v548 = vpop.permute.xlu0 %547
        %v550 = vmul.f32 %v543, %v494
        %v551 = vmul.f32 %v548, %v495
        %554 = vrot.lane.b32.xlu0 %v550, 126
        %v555 = vpop.permute.xlu0 %554
        %556 = vrot.lane.b32.xlu0 %v551, 126
        %v557 = vpop.permute.xlu0 %556
        %v560 = vadd.f32 %v535, %v555
        %v561 = vadd.f32 %v536, %v557
        %v562 = vld [vmem:[%s5] sm:$0xff]
        %v563 = vld [vmem:[%s5 + $0x8] sm:$0xff]
        %565 = vset.pattern.permute.xlu0 0
        %566 = vperm.xlu0 %565, %v562
        %v567 = vpop.permute.xlu0 %566
        %570 = vset.pattern.permute.xlu0 0
        %571 = vperm.xlu0 %570, %v563
        %v572 = vpop.permute.xlu0 %571
        %v574 = vmul.f32 %v560, %v567
        %v575 = vmul.f32 %v561, %v572
        %v576 = vld [vmem:[%s6] sm:$0xff]
        %v577 = vld [vmem:[%s6 + $0x8] sm:$0xff]
        %579 = vset.pattern.permute.xlu0 0
        %580 = vperm.xlu0 %579, %v576
        %v581 = vpop.permute.xlu0 %580
        %584 = vset.pattern.permute.xlu0 0
        %585 = vperm.xlu0 %584, %v577
        %v586 = vpop.permute.xlu0 %585
        %v588 = vadd.f32 %v574, %v581
        %v589 = vadd.f32 %v575, %v586
        %v590 = vadd.f32 %v588, 3.0
        %v591 = vadd.f32 %v589, 3.0
        %v592 = vmax.f32 %v590, 0.0
        %v593 = vmax.f32 %v591, 0.0
        %v594 = vmin.f32 %v592, 6.0
        %v595 = vmin.f32 %v593, 6.0
        %v596 = vmul.f32 %v588, %v594
        %v597 = vmul.f32 %v589, %v595
        %v598 = vmul.f32 %v596, 0.16666667
        %v599 = vmul.f32 %v597, 0.16666667
        %vm600 = vcmask 130048
        %v601 = vsel %vm600, %v598, 0.0
        %602 = vadd.xlane.f32.xlu0 %v601
        %v603 = vpop.xlane.xlu0 %602
        %v604 = vsel %vm600, %v599, 0.0
        %605 = vadd.xlane.f32.xlu0 %v604
        %v606 = vpop.xlane.xlu0 %605
        %v607 = vrcp.pop 16.0
        %v608 = vmul.f32 16.0, %v607
        %v609 = vsub.f32 1.0, %v608
        %v610 = vmul.f32 %v607, %v609
        %v611 = vadd.f32 %v607, %v610
        %vm612 = vweird.f32 %v607
        %v613 = vsel %vm612, %v607, %v611
        %v614 = vmul.f32 %v603, %v613
        %v615 = vmul.f32 %v606, %v613
        %v616 = vld [vmem:[%s7] sm:$0x3]
        %v618 = vsel %vm600, %v616, 0
        %620 = vmatpush.msra.mxu0 0.0
        %621 = vmatpush.msra.mxu0 0.0
        %622 = vmatpush.msra.mxu0 0.0
        %623 = vmatpush.msra.mxu0 0.0
        %624 = vmatpush.msra.mxu0 0.0
        %625 = vmatpush.msra.mxu0 0.0
        %626 = vmatpush.msra.mxu0 0.0
        %627 = vmatpush.msra.mxu0 0.0
        %628 = vmatpush.msra.mxu0 0.0
        %629 = vmatpush.msra.mxu0 0.0
        %630 = vmatpush.msra.mxu0 0.0
        %631 = vmatpush.msra.mxu0 0.0
        %632 = vmatpush.msra.mxu0 0.0
        %633 = vmatpush.msra.mxu0 0.0
        %634 = vmatpush.msra.mxu0 %v615
        %635 = vmatpush.msra.mxu0 %v614
        %636 = vmatmul.f32.gmra.mxu0 %v618
        %v637 = vpop.f32.mrf.mxu0
        %v638 = vadd.f32 0.0, %v637
        %639 = vdwg.mxu0
        %v640 = vadd.f32 %v638, 3.0
        %v641 = vmax.f32 %v640, 0.0
        %v642 = vmin.f32 %v641, 6.0
        %v643 = vmul.f32 %v638, %v642
        %v644 = vmul.f32 %v643, 0.16666667
        %v645 = vld [vmem:[%s8] sm:$0xff]
        %v646 = vld [vmem:[%s8 + $0x8] sm:$0xff]
        %v648 = vsel %vm480, %v645, 0
        %v651 = vsel %vm480, %v646, 0
        %vm653 = vcmask 1041408
        %v655 = vsel %vm653, %v644, 0
        %657 = vmatpush.msra.mxu0 0.0
        %658 = vmatpush.msra.mxu0 0.0
        %659 = vmatpush.msra.mxu0 0.0
        %660 = vmatpush.msra.mxu0 0.0
        %661 = vmatpush.msra.mxu0 0.0
        %662 = vmatpush.msra.mxu0 0.0
        %663 = vmatpush.msra.mxu0 0.0
        %664 = vmatpush.msra.mxu0 0.0
        %665 = vmatpush.msra.mxu0 0.0
        %666 = vmatpush.msra.mxu0 0.0
        %667 = vmatpush.msra.mxu0 0.0
        %668 = vmatpush.msra.mxu0 0.0
        %669 = vmatpush.msra.mxu0 0.0
        %670 = vmatpush.msra.mxu0 0.0
        %671 = vmatpush.msra.mxu0 0.0
        %672 = vmatpush.msra.mxu0 %v655
        %673 = vmatmul.f32.gmra.mxu0 %v648
        %v674 = vpop.f32.mrf.mxu0
        %v675 = vadd.f32 0.0, %v674
        %676 = vmatmul.f32.gmra.mxu0 %v651
        %v677 = vpop.f32.mrf.mxu0
        %v678 = vadd.f32 0.0, %v677
        %679 = vdwg.mxu0
        %v680 = vxor.u32 %v675, 2147483648
        %v681 = vxor.u32 %v678, 2147483648
        %v682 = vmul.f32 %v680, 1.442695
        %v683 = vpow.pop %v682
        %v684 = vmul.f32 %v681, 1.442695
        %v685 = vpow.pop %v684
        %v686 = vadd.f32 %v683, 1.0
        %v687 = vadd.f32 %v685, 1.0
        %v688 = vrcp.pop %v686
        %v689 = vmul.f32 %v686, %v688
        %v690 = vsub.f32 1.0, %v689
        %v691 = vmul.f32 %v688, %v690
        %v692 = vadd.f32 %v688, %v691
        %vm693 = vweird.f32 %v686
        %vm694 = vweird.f32 %v688
        %vm695 = vmor %vm693, %vm694
        %v696 = vsel %vm695, %v688, %v692
        %v697 = vand.u32 2147483647, %v686
        %vm698 = vcmp.eq.f32.partialorder %v697, 8.507059e+37
        %v699 = vand.u32 %v686, 2147483648
        %v700 = vor.u32 1.1754944e-38, %v699
        %v701 = vsel %vm698, %v700, %v696
        %v702 = vmul.f32 1.0, %v701
        %v703 = vrcp.pop %v687
        %v704 = vmul.f32 %v687, %v703
        %v705 = vsub.f32 1.0, %v704
        %v706 = vmul.f32 %v703, %v705
        %v707 = vadd.f32 %v703, %v706
        %vm708 = vweird.f32 %v687
        %vm709 = vweird.f32 %v703
        %vm710 = vmor %vm708, %vm709
        %v711 = vsel %vm710, %v703, %v707
        %v712 = vand.u32 2147483647, %v687
        %vm713 = vcmp.eq.f32.partialorder %v712, 8.507059e+37
        %v714 = vand.u32 %v687, 2147483648
        %v715 = vor.u32 1.1754944e-38, %v714
        %v716 = vsel %vm713, %v715, %v711
        %v717 = vmul.f32 1.0, %v716
        %719 = vset.pattern.permute.xlu0 0
        %720 = vperm.xlu0 %719, %v702
        %v721 = vpop.permute.xlu0 %720
        %724 = vset.pattern.permute.xlu0 0
        %725 = vperm.xlu0 %724, %v717
        %v726 = vpop.permute.xlu0 %725
        %v728 = vmul.f32 %v598, %v721
        %v729 = vmul.f32 %v599, %v726
        %v730 = vld [vmem:[%s9] sm:$0xff]
        %v732 = vsel %vm600, %v730, 0
        %734 = vmatpush.msra.mxu0 0.0
        %735 = vmatpush.msra.mxu0 0.0
        %736 = vmatpush.msra.mxu0 0.0
        %737 = vmatpush.msra.mxu0 0.0
        %738 = vmatpush.msra.mxu0 0.0
        %739 = vmatpush.msra.mxu0 0.0
        %740 = vmatpush.msra.mxu0 0.0
        %741 = vmatpush.msra.mxu0 0.0
        %742 = vmatpush.msra.mxu0 0.0
        %743 = vmatpush.msra.mxu0 0.0
        %744 = vmatpush.msra.mxu0 0.0
        %745 = vmatpush.msra.mxu0 0.0
        %746 = vmatpush.msra.mxu0 0.0
        %747 = vmatpush.msra.mxu0 0.0
        %748 = vmatpush.msra.mxu0 %v729
        %749 = vmatpush.msra.mxu0 %v728
        %750 = vmatmul.f32.gmra.mxu0 %v732
        %v751 = vpop.f32.mrf.mxu0
        %v752 = vadd.f32 0.0, %v751
        %753 = vdwg.mxu0
        %v754 = vld [vmem:[%s10] sm:$0xff]
        %756 = vset.pattern.permute.xlu0 0
        %757 = vperm.xlu0 %756, %v754
        %v758 = vpop.permute.xlu0 %757
        %v760 = vmul.f32 %v752, %v758
        %v761 = vld [vmem:[%s11] sm:$0xff]
        %763 = vset.pattern.permute.xlu0 0
        %764 = vperm.xlu0 %763, %v761
        %v765 = vpop.permute.xlu0 %764
        %v767 = vadd.f32 %v760, %v765
        %v768 = vadd.f32 %v767, %v409
        %769 = vst.msk [vmem:[%s404] sm:$0xff] %vm600, %v768
        %s770 = sand.u32 %s291, 1
        %s771 = scalar_lea.sflag [#allocation4], %s770
        %s772 = sand.u32 %s291, 1
        %s773 = smul.addr %s772, 8
        %s774 = scalar_lea.vmem [#allocation3], %s773
        // Predicated region
        $region69: #{tpu_custom_call.1} parent=67 // pred_check
          %p775 = pneg %p301
        $region70: #{tpu_custom_call.1} parent=67 // pred_check_branch
          %777 = sbr.rel (%p775) target = $region72
        $region71: #{tpu_custom_call.1} parent=67 // pred_region
          %779 = vsyncadd %s771, 0
          %s780 = smul.addr %s26, 8
          %s781 = scalar_lea.hbm %s12, %s780
          %s783 = sshll.u32 %s774, 4
          %s784 = int_to_ptr.vmem [resolvable:$true] %s783
          %s785 = sshll.u32 %s781, 4
          %s786 = int_to_ptr.hbm [resolvable:$true] %s785
          %788 = dma.vmem_to_hbm [thread:$0]  %s784, 128, %s786, %s771
        $region72: #{tpu_custom_call.1} parent=67 // pred_fallthru
          _
      $region68: #{tpu_custom_call.1} parent=5 // pred_fallthru
        _
      %p789 = scmp.le.s32.totalorder 2, %s21
      // Predicated region
      $region73: #{tpu_custom_call.1} parent=5 // pred_check
        %p790 = pneg %p789
      $region74: #{tpu_custom_call.1} parent=5 // pred_check_branch
        %792 = sbr.rel (%p790) target = $region76
      $region75: #{tpu_custom_call.1} parent=5 // pred_region
        %s793 = ssub.s32 %s21, 2
        // Predicated region
        $region77: #{tpu_custom_call.1} parent=75 // pred_check
          %p794 = pneg %p307
        $region78: #{tpu_custom_call.1} parent=75 // pred_check_branch
          %796 = sbr.rel (%p794) target = $region80
        $region79: #{tpu_custom_call.1} parent=75 // pred_region
          %s797 = sand.u32 %s292, 1
          %s798 = scalar_lea.sflag [#allocation4], %s797
          %s799 = sand.u32 %s292, 1
          %s800 = smul.addr %s799, 8
          %s801 = scalar_lea.vmem [#allocation3], %s800
          %803 = dma.done %s798, 128
        $region80: #{tpu_custom_call.1} parent=75 // pred_fallthru
          _
      $region76: #{tpu_custom_call.1} parent=5 // pred_fallthru
        _
    $region6: #{tpu_custom_call.1} parent=1 // loop_footer
      %s25 = sadd.s32 1, %s21
    $region7: #{tpu_custom_call.1} parent=1 // loop_footer_branch
      %20 = sbr.rel target = $region3
    $region8: #{tpu_custom_call.1} parent=1 // loop_exit
      _
    %804 = vsyncpa [#allocation4], 1
    %s805 = scalar_lea.sflag [#allocation4], 1
    %806 = vsyncpa %s805, 1

</llo_original>
